<compile_context>
chip_gen: v7x
topology: tpu7x:2x2x1
jax: 0.10.0
libtpu: 0.0.40
codegen_flags: <defaults>
</compile_context>

<pallas_src>
import functools

import jax
import jax.numpy as jnp
from jax.experimental import pallas as pl
from jax.experimental.pallas import tpu as pltpu

NB_PARAM = 2        # input / decoder features
HIDDEN = 3          # encoder (hidden) size
OUT_ROWS = HIDDEN + NB_PARAM  # stacked output rows: [enc(3) ; dec(2)]

# Flat packed-parameter layout (row-major):
#   w1 (NB_PARAM, HIDDEN) | b1 (HIDDEN,) | w4 (HIDDEN, NB_PARAM) | b4 (NB_PARAM,)
_W1_OFF = 0
_B1_OFF = _W1_OFF + NB_PARAM * HIDDEN
_W4_OFF = _B1_OFF + HIDDEN
_B4_OFF = _W4_OFF + HIDDEN * NB_PARAM
_N_PARAMS = _B4_OFF + NB_PARAM  # 17


def _ae_kernel(p_ref, x_ref, out_ref):
    """Fused 2->3->2 forward.

    p_ref   : SMEM f32[17]           packed weights/biases (scalar prefetch)
    x_ref   : VMEM f32[NB_PARAM, T]  batch on lanes
    out_ref : VMEM f32[OUT_ROWS, T]  rows 0..HIDDEN-1 = relu(fc1), rest = fc4
    """
    t = x_ref.shape[1]
    x_rows = [x_ref[k:k + 1, :] for k in range(NB_PARAM)]  # each (1, T)

    # fc1 + ReLU  (encoder) -- VPU broadcast FMAs, fully unrolled (tiny dims).
    h_rows = []
    for j in range(HIDDEN):
        acc = jnp.full((1, t), p_ref[_B1_OFF + j], jnp.float32)
        for k in range(NB_PARAM):
            acc = acc + p_ref[_W1_OFF + k * HIDDEN + j] * x_rows[k]
        h_rows.append(jnp.maximum(acc, 0.0))

    # fc4 (no activation)  (decoder)
    d_rows = []
    for j in range(NB_PARAM):
        acc = jnp.full((1, t), p_ref[_B4_OFF + j], jnp.float32)
        for k in range(HIDDEN):
            acc = acc + p_ref[_W4_OFF + k * NB_PARAM + j] * h_rows[k]
        d_rows.append(acc)

    # Single lane-dense stacked output store.
    out_ref[...] = jnp.concatenate(h_rows + d_rows, axis=0)


@functools.partial(jax.jit, static_argnames=("batch_tile",))
def autoencoder_one_three(x, params, batch_tile=2048):
    """Fused forward pass of Autoencoder_One_Three.

    x:      (N, NB_PARAM) float32
    params: dict with w1 (NB_PARAM, HIDDEN), b1 (HIDDEN,),
                      w4 (HIDDEN, NB_PARAM), b4 (NB_PARAM,)
    returns (encoder_out (N, HIDDEN), decoder_out (N, NB_PARAM))
    """
    n, f = x.shape
    assert f == NB_PARAM
    assert batch_tile % 128 == 0, "batch_tile must be a lane multiple (128)"

    # Pack all weights/biases into one flat f32[17] scalar-prefetch operand.
    packed = jnp.concatenate([
        params["w1"].reshape(-1),
        params["b1"].reshape(-1),
        params["w4"].reshape(-1),
        params["b4"].reshape(-1),
    ]).astype(jnp.float32)

    # Pad the batch to a tile multiple; layout-transpose so batch is on lanes.
    n_pad = ((n + batch_tile - 1) // batch_tile) * batch_tile
    x_t = jnp.pad(x.astype(jnp.float32).T, ((0, 0), (0, n_pad - n)))  # (NB_PARAM, n_pad)

    grid = (n_pad // batch_tile,)

    out = pl.pallas_call(
        _ae_kernel,
        out_shape=jax.ShapeDtypeStruct((OUT_ROWS, n_pad), jnp.float32),
        grid_spec=pltpu.PrefetchScalarGridSpec(
            num_scalar_prefetch=1,
            grid=grid,
            in_specs=[
                pl.BlockSpec((NB_PARAM, batch_tile), lambda i, p: (0, i)),
            ],
            out_specs=pl.BlockSpec((OUT_ROWS, batch_tile), lambda i, p: (0, i)),
        ),
        compiler_params=pltpu.CompilerParams(
            dimension_semantics=("parallel",)),
    )(packed, x_t)

    enc = out[:HIDDEN, :n].T          # (N, HIDDEN)
    dec = out[HIDDEN:, :n].T          # (N, NB_PARAM)
    return enc, dec


def init_params(key):
    """nn.Linear-style init: U(-1/sqrt(fan_in), 1/sqrt(fan_in)); (in, out) weights."""
    dims = [("1", NB_PARAM, HIDDEN),   # fc1
            ("4", HIDDEN, NB_PARAM)]   # fc4
    params = {}
    for name, fan_in, fan_out in dims:
        key, kw, kb = jax.random.split(key, 3)
        bound = 1.0 / jnp.sqrt(float(fan_in))
        params[f"w{name}"] = jax.random.uniform(
            kw, (fan_in, fan_out), jnp.float32, minval=-bound, maxval=bound)
        params[f"b{name}"] = jax.random.uniform(
            kb, (fan_out,), jnp.float32, minval=-bound, maxval=bound)
    return params


def reference_forward(x, p):
    enc = jnp.maximum(x @ p["w1"] + p["b1"], 0.0)
    dec = enc @ p["w4"] + p["b4"]
    return enc, dec


if __name__ == "__main__":
    key = jax.random.PRNGKey(0)
    key, kx = jax.random.split(key)

    batch = 200  # intentionally not a tile multiple -> exercises padding path
    x = jax.random.normal(kx, (batch, NB_PARAM), jnp.float32)
    params = init_params(key)

    enc, dec = autoencoder_one_three(x, params, batch_tile=128)
    enc, dec = jax.block_until_ready((enc, dec))

    enc_ref, dec_ref = reference_forward(x, params)
    assert enc.shape == (batch, HIDDEN)
    assert dec.shape == (batch, NB_PARAM)
    assert jnp.allclose(enc, enc_ref, atol=1e-5, rtol=1e-5)
    assert jnp.allclose(dec, dec_ref, atol=1e-5, rtol=1e-5)

    print("KERNEL_OK")
</pallas_src>

<mosaic_0001>
module attributes {stable_mosaic.version = 11 : i64} {
  func.func @_ae_kernel(%arg0: i32, %arg1: memref<17xf32, #tpu.memory_space<smem>>, %arg2: memref<2x128xf32, #tpu.memory_space<vmem>>, %arg3: memref<5x128xf32, #tpu.memory_space<vmem>>) attributes {dimension_semantics = [#tpu.dimension_semantics<parallel>], iteration_bounds = array<i64: 2>, scalar_prefetch = 1 : i64, scratch_operands = 0 : i64, tpu.core_type = #tpu.core_type<tc>, window_params = [{transform_indices = @transform_0, window_bounds = array<i64: 2, 128>}, {transform_indices = @transform_1, window_bounds = array<i64: 5, 128>}]} {
    %c0 = arith.constant 0 : index
    %c0_0 = arith.constant 0 : index
    %0 = vector.load %arg2[%c0, %c0_0] : memref<2x128xf32, #tpu.memory_space<vmem>>, vector<1x128xf32>
    %c1 = arith.constant 1 : index
    %c0_1 = arith.constant 0 : index
    %1 = vector.load %arg2[%c1, %c0_1] : memref<2x128xf32, #tpu.memory_space<vmem>>, vector<1x128xf32>
    %c6 = arith.constant 6 : index
    %2 = memref.load %arg1[%c6] : memref<17xf32, #tpu.memory_space<smem>>
    %3 = vector.broadcast %2 : f32 to vector<1x128xf32>
    %c0_2 = arith.constant 0 : index
    %4 = memref.load %arg1[%c0_2] : memref<17xf32, #tpu.memory_space<smem>>
    %5 = vector.broadcast %4 : f32 to vector<1x128xf32>
    %6 = arith.mulf %5, %0 : vector<1x128xf32>
    %7 = arith.addf %3, %6 : vector<1x128xf32>
    %c3 = arith.constant 3 : index
    %8 = memref.load %arg1[%c3] : memref<17xf32, #tpu.memory_space<smem>>
    %9 = vector.broadcast %8 : f32 to vector<1x128xf32>
    %10 = arith.mulf %9, %1 : vector<1x128xf32>
    %11 = arith.addf %7, %10 : vector<1x128xf32>
    %cst = arith.constant 0.000000e+00 : f32
    %12 = vector.broadcast %cst : f32 to vector<1x128xf32>
    %13 = arith.maximumf %11, %12 : vector<1x128xf32>
    %c7 = arith.constant 7 : index
    %14 = memref.load %arg1[%c7] : memref<17xf32, #tpu.memory_space<smem>>
    %15 = vector.broadcast %14 : f32 to vector<1x128xf32>
    %c1_3 = arith.constant 1 : index
    %16 = memref.load %arg1[%c1_3] : memref<17xf32, #tpu.memory_space<smem>>
    %17 = vector.broadcast %16 : f32 to vector<1x128xf32>
    %18 = arith.mulf %17, %0 : vector<1x128xf32>
    %19 = arith.addf %15, %18 : vector<1x128xf32>
    %c4 = arith.constant 4 : index
    %20 = memref.load %arg1[%c4] : memref<17xf32, #tpu.memory_space<smem>>
    %21 = vector.broadcast %20 : f32 to vector<1x128xf32>
    %22 = arith.mulf %21, %1 : vector<1x128xf32>
    %23 = arith.addf %19, %22 : vector<1x128xf32>
    %cst_4 = arith.constant 0.000000e+00 : f32
    %24 = vector.broadcast %cst_4 : f32 to vector<1x128xf32>
    %25 = arith.maximumf %23, %24 : vector<1x128xf32>
    %c8 = arith.constant 8 : index
    %26 = memref.load %arg1[%c8] : memref<17xf32, #tpu.memory_space<smem>>
    %27 = vector.broadcast %26 : f32 to vector<1x128xf32>
    %c2 = arith.constant 2 : index
    %28 = memref.load %arg1[%c2] : memref<17xf32, #tpu.memory_space<smem>>
    %29 = vector.broadcast %28 : f32 to vector<1x128xf32>
    %30 = arith.mulf %29, %0 : vector<1x128xf32>
    %31 = arith.addf %27, %30 : vector<1x128xf32>
    %c5 = arith.constant 5 : index
    %32 = memref.load %arg1[%c5] : memref<17xf32, #tpu.memory_space<smem>>
    %33 = vector.broadcast %32 : f32 to vector<1x128xf32>
    %34 = arith.mulf %33, %1 : vector<1x128xf32>
    %35 = arith.addf %31, %34 : vector<1x128xf32>
    %cst_5 = arith.constant 0.000000e+00 : f32
    %36 = vector.broadcast %cst_5 : f32 to vector<1x128xf32>
    %37 = arith.maximumf %35, %36 : vector<1x128xf32>
    %c15 = arith.constant 15 : index
    %38 = memref.load %arg1[%c15] : memref<17xf32, #tpu.memory_space<smem>>
    %39 = vector.broadcast %38 : f32 to vector<1x128xf32>
    %c9 = arith.constant 9 : index
    %40 = memref.load %arg1[%c9] : memref<17xf32, #tpu.memory_space<smem>>
    %41 = vector.broadcast %40 : f32 to vector<1x128xf32>
    %42 = arith.mulf %41, %13 : vector<1x128xf32>
    %43 = arith.addf %39, %42 : vector<1x128xf32>
    %c11 = arith.constant 11 : index
    %44 = memref.load %arg1[%c11] : memref<17xf32, #tpu.memory_space<smem>>
    %45 = vector.broadcast %44 : f32 to vector<1x128xf32>
    %46 = arith.mulf %45, %25 : vector<1x128xf32>
    %47 = arith.addf %43, %46 : vector<1x128xf32>
    %c13 = arith.constant 13 : index
    %48 = memref.load %arg1[%c13] : memref<17xf32, #tpu.memory_space<smem>>
    %49 = vector.broadcast %48 : f32 to vector<1x128xf32>
    %50 = arith.mulf %49, %37 : vector<1x128xf32>
    %51 = arith.addf %47, %50 : vector<1x128xf32>
    %c16 = arith.constant 16 : index
    %52 = memref.load %arg1[%c16] : memref<17xf32, #tpu.memory_space<smem>>
    %53 = vector.broadcast %52 : f32 to vector<1x128xf32>
    %c10 = arith.constant 10 : index
    %54 = memref.load %arg1[%c10] : memref<17xf32, #tpu.memory_space<smem>>
    %55 = vector.broadcast %54 : f32 to vector<1x128xf32>
    %56 = arith.mulf %55, %13 : vector<1x128xf32>
    %57 = arith.addf %53, %56 : vector<1x128xf32>
    %c12 = arith.constant 12 : index
    %58 = memref.load %arg1[%c12] : memref<17xf32, #tpu.memory_space<smem>>
    %59 = vector.broadcast %58 : f32 to vector<1x128xf32>
    %60 = arith.mulf %59, %25 : vector<1x128xf32>
    %61 = arith.addf %57, %60 : vector<1x128xf32>
    %c14 = arith.constant 14 : index
    %62 = memref.load %arg1[%c14] : memref<17xf32, #tpu.memory_space<smem>>
    %63 = vector.broadcast %62 : f32 to vector<1x128xf32>
    %64 = arith.mulf %63, %37 : vector<1x128xf32>
    %65 = arith.addf %61, %64 : vector<1x128xf32>
    %66 = tpu.concatenate %13, %25, %37, %51, %65 in 0 : vector<1x128xf32>, vector<1x128xf32>, vector<1x128xf32>, vector<1x128xf32>, vector<1x128xf32> -> vector<5x128xf32>
    %c0_6 = arith.constant 0 : index
    %c0_7 = arith.constant 0 : index
    %67 = vector.load %arg3[%c0_6, %c0_7] : memref<5x128xf32, #tpu.memory_space<vmem>>, vector<5x128xf32>
    tpu.vector_store %arg3[%c0_6, %c0_7], %66 {strides = array<i32>} : memref<5x128xf32, #tpu.memory_space<vmem>>, vector<5x128xf32>,
    return
  }
  func.func @transform_0(%arg0: i32, %arg1: memref<17xf32, #tpu.memory_space<smem>>) -> (i32, i32) {
    %c0_i32 = arith.constant 0 : i32
    %c0_i32_0 = arith.constant 0 : i32
    return %c0_i32, %arg0 : i32, i32
  }
  func.func @transform_1(%arg0: i32, %arg1: memref<17xf32, #tpu.memory_space<smem>>) -> (i32, i32) {
    %c0_i32 = arith.constant 0 : i32
    %c0_i32_0 = arith.constant 0 : i32
    return %c0_i32, %arg0 : i32, i32
  }
}

</mosaic_0001>

<llo_original>
// kernel: autoencoder_one_three.1
$region0: #{autoencoder_one_three.1}
  #allocation0 [shape = 'u32[]', space=smem, size = 0x4, offset = 0x4, fixed_abs, tag = 'smem constant byte address 0x4 - core index']
  #allocation1 [shape = 'u32[144,128]{1,0:T(1,128)}', space=vmem, size = 0x12000, scoped, tag = 'internal scratch']
  #allocation2 [shape = 's32[1]{0}', space=sflag, size = 0x4, scoped, tag = 'scoped memory for autoencoder_one_three.1']
  #allocation3 [shape = 'u8[512]{0}', space=smem, size = 0x200, scoped, tag = 'prefetched SMEM operand 0']
  %s0 = inlined_call_operand.vmem [shape: f32[17], index: 0, kind: input, shape index: {}]
  %s1 = inlined_call_operand.vmem [shape: f32[2,256], index: 1, kind: input, shape index: {}]
  %s2 = inlined_call_operand.vmem [shape: f32[5,256], index: 2, kind: output, shape index: {}]
  %s3 = sld [smem:[#allocation0]]
  $region37: #{autoencoder_one_three.1} parent=0
    _
  %s5 = ssub.s32 1, %s3
  %s6 = scalar_select 0, %s5, %s3
  %s7 = sshll.u32 %s0, 4
  %s8 = int_to_ptr.vmem [resolvable:$true] %s7
  %10 = dma.vmem_to_smem %s8, 16, [#allocation3], [#allocation2]
  %11 = dma.done [#allocation2], 16
  %12 = sfence
  loop: start=0, step=1, limit=4
  $region2: #{autoencoder_one_three.1} parent=0 // loop_pre_header
    _
  $region3: #{autoencoder_one_three.1} parent=0 // loop_header
    %s14 = sphi 0, %s18
    %p15 = scmp.ge.s32.totalorder %s14, 4
    %s24 = sphi 0, %s26
    %s27 = sphi 0, %s24
    %s28 = sphi 0, %s27
    %s44 = sphi 0, %s28
    %s50 = sphi 0, %s52
    %s53 = sphi 0, %s50
    %s54 = sphi 0, %s53
    %s70 = sphi 0, %s54
  $region4: #{autoencoder_one_three.1} parent=0 // loop_header_branch
    %17 = sbr.rel (%p15) target = $region8
  $region5: #{autoencoder_one_three.1} parent=0 // loop_body
    %s19 = ssub.s32 %s14, 1
    %s20 = ssub.s32 %s14, 2
    %s21 = sadd.s32 %s14, 1
    %s22 = ssub.s32 %s14, %s21
    %p23 = scmp.eq.s32.totalorder %s22, 0
    %s25 = sadd.s32 %s24, 1
    %s26 = scalar_select %p23, %s24, %s25
    %p29 = pneg %p23
    %p30 = scmp.eq.s32.totalorder %s14, 1
    %p31 = por %p29, %p30
    %p32 = scmp.ne.s32.totalorder %s24, %s27
    %p33 = scmp.eq.s32.totalorder %s14, 0
    %p34 = por %p32, %p33
    %p35 = scmp.ne.s32.totalorder %s24, %s27
    %p36 = scmp.eq.s32.totalorder %s19, 1
    %p37 = por %p35, %p36
    %p38 = scmp.ne.s32.totalorder %s27, %s28
    %p39 = scmp.eq.s32.totalorder %s19, 0
    %p40 = por %p38, %p39
    %p41 = scmp.ne.s32.totalorder %s27, %s28
    %p42 = scmp.eq.s32.totalorder %s20, 1
    %p43 = por %p41, %p42
    %p45 = scmp.ne.s32.totalorder %s28, %s44
    %p46 = scmp.eq.s32.totalorder %s20, 0
    %p47 = por %p45, %p46
    %s48 = ssub.s32 %s14, %s21
    %p49 = scmp.eq.s32.totalorder %s48, 0
    %s51 = sadd.s32 %s50, 1
    %s52 = scalar_select %p49, %s50, %s51
    %p55 = pneg %p49
    %p56 = scmp.eq.s32.totalorder %s14, 1
    %p57 = por %p55, %p56
    %p58 = scmp.ne.s32.totalorder %s50, %s53
    %p59 = scmp.eq.s32.totalorder %s14, 0
    %p60 = por %p58, %p59
    %p61 = scmp.ne.s32.totalorder %s50, %s53
    %p62 = scmp.eq.s32.totalorder %s19, 1
    %p63 = por %p61, %p62
    %p64 = scmp.ne.s32.totalorder %s53, %s54
    %p65 = scmp.eq.s32.totalorder %s19, 0
    %p66 = por %p64, %p65
    %p67 = scmp.ne.s32.totalorder %s53, %s54
    %p68 = scmp.eq.s32.totalorder %s20, 1
    %p69 = por %p67, %p68
    %p71 = scmp.ne.s32.totalorder %s54, %s70
    %p72 = scmp.eq.s32.totalorder %s20, 0
    %p73 = por %p71, %p72
    %p74 = scmp.le.s32.totalorder 1, %s14
    %p75 = scmp.lt.s32.totalorder %s14, 3
    %p76 = pnand %p74, %p75
    %p77 = pneg %p76
    // Predicated region
    $region9: #{autoencoder_one_three.1} parent=5 // pred_check
      _
    $region10: #{autoencoder_one_three.1} parent=5 // pred_check_branch
      %79 = sbr.rel (%p76) target = $region12
    $region11: #{autoencoder_one_three.1} parent=5 // pred_region
      %s80 = ssub.s32 %s14, 1
    $region12: #{autoencoder_one_three.1} parent=5 // pred_fallthru
      _
    %p81 = scmp.lt.s32.totalorder %s14, 2
    // Predicated region
    $region13: #{autoencoder_one_three.1} parent=5 // pred_check
      %p82 = pneg %p81
    $region14: #{autoencoder_one_three.1} parent=5 // pred_check_branch
      %84 = sbr.rel (%p82) target = $region16
    $region15: #{autoencoder_one_three.1} parent=5 // pred_region
      // Predicated region
      $region17: #{autoencoder_one_three.1} parent=15 // pred_check
        %p85 = pneg %p34
      $region18: #{autoencoder_one_three.1} parent=15 // pred_check_branch
        %87 = sbr.rel (%p85) target = $region20
      $region19: #{autoencoder_one_three.1} parent=15 // pred_region
        %p88 = scmp.lt.s32.totalorder %s14, 1
        %s89 = scalar_select %p88, %s14, 1
        %s90 = smul.addr %s89, 2
        %s91 = scalar_lea.vmem %s1, %s90
      $region20: #{autoencoder_one_three.1} parent=15 // pred_fallthru
        _
    $region16: #{autoencoder_one_three.1} parent=5 // pred_fallthru
      _
    %p92 = scmp.le.s32.totalorder 1, %s14
    %p93 = scmp.lt.s32.totalorder %s14, 3
    %p94 = pnand %p92, %p93
    %p95 = pneg %p94
    // Predicated region
    $region21: #{autoencoder_one_three.1} parent=5 // pred_check
      _
    $region22: #{autoencoder_one_three.1} parent=5 // pred_check_branch
      %97 = sbr.rel (%p94) target = $region24
    $region23: #{autoencoder_one_three.1} parent=5 // pred_region
      %s98 = ssub.s32 %s14, 1
      %p99 = scmp.lt.s32.totalorder %s19, 1
      %s100 = scalar_select %p99, %s19, 1
      %s101 = smul.addr %s100, 2
      %s102 = scalar_lea.vmem %s1, %s101
      %p103 = pneg %p40
      %p104 = pneg %p37
      %p105 = pneg %p66
      %p106 = pneg %p63
      %p107 = scmp.lt.s32.totalorder %s19, 1
      %s108 = scalar_select %p107, %s19, 1
      %s109 = smul.addr %s108, 8
      %s110 = scalar_lea.vmem %s2, %s109
      %p111 = scmp.lt.s32.totalorder %s19, 1
      %s112 = scalar_select %p111, %s19, 1
      %s113 = smul.addr %s112, 2
      %s114 = scalar_lea.vmem %s1, %s113
      %p115 = scmp.lt.s32.totalorder %s19, 1
      %s116 = scalar_select %p115, %s19, 1
      %s117 = smul.addr %s116, 8
      %s118 = scalar_lea.vmem %s2, %s117
      %v119 = vld [vmem:[%s114] sm:$0x1]
      %v120 = vld [vmem:[%s114 + $0x1] sm:$0x1]
      %s121 = sld [smem:[#allocation3 + $0x6]]
      %v122 = vstv %s121
      %s123 = sld [smem:[#allocation3]]
      %v124 = vstv %s123
      %v125 = vmul.f32 %v124, %v119
      %v126 = vadd.f32 %v122, %v125
      %s127 = sld [smem:[#allocation3 + $0x3]]
      %v128 = vstv %s127
      %v129 = vmul.f32 %v128, %v120
      %v130 = vadd.f32 %v126, %v129
      %v131 = vmax.f32 %v130, 0.0
      %s132 = sld [smem:[#allocation3 + $0x7]]
      %v133 = vstv %s132
      %s134 = sld [smem:[#allocation3 + $0x1]]
      %v135 = vstv %s134
      %v136 = vmul.f32 %v135, %v119
      %v137 = vadd.f32 %v133, %v136
      %s138 = sld [smem:[#allocation3 + $0x4]]
      %v139 = vstv %s138
      %v140 = vmul.f32 %v139, %v120
      %v141 = vadd.f32 %v137, %v140
      %v142 = vmax.f32 %v141, 0.0
      %s143 = sld [smem:[#allocation3 + $0x8]]
      %v144 = vstv %s143
      %s145 = sld [smem:[#allocation3 + $0x2]]
      %v146 = vstv %s145
      %v147 = vmul.f32 %v146, %v119
      %v148 = vadd.f32 %v144, %v147
      %s149 = sld [smem:[#allocation3 + $0x5]]
      %v150 = vstv %s149
      %v151 = vmul.f32 %v150, %v120
      %v152 = vadd.f32 %v148, %v151
      %v153 = vmax.f32 %v152, 0.0
      %s154 = sld [smem:[#allocation3 + $0xf]]
      %v155 = vstv %s154
      %s156 = sld [smem:[#allocation3 + $0x9]]
      %v157 = vstv %s156
      %v158 = vmul.f32 %v157, %v131
      %v159 = vadd.f32 %v155, %v158
      %s160 = sld [smem:[#allocation3 + $0xb]]
      %v161 = vstv %s160
      %v162 = vmul.f32 %v161, %v142
      %v163 = vadd.f32 %v159, %v162
      %s164 = sld [smem:[#allocation3 + $0xd]]
      %v165 = vstv %s164
      %v166 = vmul.f32 %v165, %v153
      %v167 = vadd.f32 %v163, %v166
      %s168 = sld [smem:[#allocation3 + $0x10]]
      %v169 = vstv %s168
      %s170 = sld [smem:[#allocation3 + $0xa]]
      %v171 = vstv %s170
      %v172 = vmul.f32 %v171, %v131
      %v173 = vadd.f32 %v169, %v172
      %s174 = sld [smem:[#allocation3 + $0xc]]
      %v175 = vstv %s174
      %v176 = vmul.f32 %v175, %v142
      %v177 = vadd.f32 %v173, %v176
      %s178 = sld [smem:[#allocation3 + $0xe]]
      %v179 = vstv %s178
      %v180 = vmul.f32 %v179, %v153
      %v181 = vadd.f32 %v177, %v180
      %v183 = vrot.slane %v142, 7
      %v186 = vrot.slane %v153, 6
      %v189 = vrot.slane %v167, 5
      %v192 = vrot.slane %v181, 4
      %vm194 = vcmask 1040384
      %v195 = vsel %vm194, %v131, %v183
      %vm196 = vcmask 1041408
      %v197 = vsel %vm196, %v195, %v186
      %vm198 = vcmask 1042432
      %v199 = vsel %vm198, %v197, %v189
      %vm200 = vcmask 1043456
      %v201 = vsel %vm200, %v199, %v192
      %202 = vst [vmem:[%s118] sm:$0x1f] %v201
      %p203 = scmp.lt.s32.totalorder %s19, 1
      %s204 = scalar_select %p203, %s19, 1
      %s205 = smul.addr %s204, 8
      %s206 = scalar_lea.vmem %s2, %s205
      // Predicated region
      $region25: #{autoencoder_one_three.1} parent=23 // pred_check
        %p207 = pneg %p63
      $region26: #{autoencoder_one_three.1} parent=23 // pred_check_branch
        %209 = sbr.rel (%p207) target = $region28
      $region27: #{autoencoder_one_three.1} parent=23 // pred_region
        _
      $region28: #{autoencoder_one_three.1} parent=23 // pred_fallthru
        _
    $region24: #{autoencoder_one_three.1} parent=5 // pred_fallthru
      _
    %p210 = scmp.le.s32.totalorder 2, %s14
    // Predicated region
    $region29: #{autoencoder_one_three.1} parent=5 // pred_check
      %p211 = pneg %p210
    $region30: #{autoencoder_one_three.1} parent=5 // pred_check_branch
      %213 = sbr.rel (%p211) target = $region32
    $region31: #{autoencoder_one_three.1} parent=5 // pred_region
      %s214 = ssub.s32 %s14, 2
      // Predicated region
      $region33: #{autoencoder_one_three.1} parent=31 // pred_check
        %p215 = pneg %p69
      $region34: #{autoencoder_one_three.1} parent=31 // pred_check_branch
        %217 = sbr.rel (%p215) target = $region36
      $region35: #{autoencoder_one_three.1} parent=31 // pred_region
        %p218 = scmp.lt.s32.totalorder %s20, 1
        %s219 = scalar_select %p218, %s20, 1
        %s220 = smul.addr %s219, 8
        %s221 = scalar_lea.vmem %s2, %s220
      $region36: #{autoencoder_one_three.1} parent=31 // pred_fallthru
        _
    $region32: #{autoencoder_one_three.1} parent=5 // pred_fallthru
      _
  $region6: #{autoencoder_one_three.1} parent=0 // loop_footer
    %s18 = sadd.s32 1, %s14
  $region7: #{autoencoder_one_three.1} parent=0 // loop_footer_branch
    %13 = sbr.rel target = $region3
  $region8: #{autoencoder_one_three.1} parent=0 // loop_exit
    _

</llo_original>
